<compile_context>
chip_gen: v7x
topology: tpu7x:2x2x1
jax: 0.10.0
libtpu: 0.0.40
codegen_flags: <defaults>
</compile_context>

<pallas_src>
from functools import partial

import jax
import jax.numpy as jnp
from jax.experimental import pallas as pl
from jax.experimental.pallas import tpu as pltpu


# ----------------------------------------------------------------------------
# Kernel
# ----------------------------------------------------------------------------
def gcn_kernel(x_ref, adj_ref, dinv_ref, w1_ref, b1_ref, w2_ref, b2_ref,
               out_ref):
    adj = adj_ref[...]                      # (N, N), f32 or bf16
    dinv = dinv_ref[...]                    # (N, 1), f32 (precomputed outside)

    # Layer 1: relu( D^-1/2 A D^-1/2 @ (X W1) + b1 )
    #        = relu( dinv * (A @ (dinv * (X W1))) + b1 )
    support = jnp.dot(x_ref[...], w1_ref[...],
                      preferred_element_type=jnp.float32)              # (N, Hp)
    agg = jnp.dot(adj, (dinv * support).astype(adj.dtype),
                  preferred_element_type=jnp.float32)                  # (N, Hp)
    h = jnp.maximum(dinv * agg + b1_ref[...], 0.0)
    # F.dropout(p=0.0) is the identity.

    # Layer 2: D^-1/2 A D^-1/2 @ (H W2) + b2
    support2 = jnp.dot(h, w2_ref[...],
                       preferred_element_type=jnp.float32)             # (N, Hp)
    agg2 = jnp.dot(adj, (dinv * support2).astype(adj.dtype),
                   preferred_element_type=jnp.float32)                 # (N, Hp)
    out_ref[...] = dinv * agg2 + b2_ref[...]


# ----------------------------------------------------------------------------
# Wrapper
# ----------------------------------------------------------------------------
def _round_up(v, m):
    return pl.cdiv(v, m) * m


def _default_vmem_limit_bytes():
    # Raise the scoped-VMEM budget toward the physical capacity of this
    # generation (128 MiB on v5e/v6e, 64 MiB/TC on v7x), leaving 25% headroom.
    try:
        return int(pltpu.get_tpu_info().vmem_capacity_bytes) * 3 // 4
    except Exception:
        return None


_VMEM_LIMIT_BYTES = _default_vmem_limit_bytes()


def prepare_gcn_params(w1, b1, w2, b2):
    """Pad parameters once at init (hoisted out of the per-call forward path).

    F_in and H are zero-padded to multiples of 128 so every matmul operand and
    every (N, Hp) activation tile is lane-dense.  The padding is numerically
    exact and the padded output columns stay exactly zero.
    """
    f_in, h = w1.shape
    f_pad = _round_up(f_in, 128)
    h_pad = _round_up(h, 128)
    w1p = jnp.pad(w1.astype(jnp.float32), ((0, f_pad - f_in), (0, h_pad - h)))
    b1p = jnp.pad(b1.astype(jnp.float32).reshape(1, -1),
                  ((0, 0), (0, h_pad - h)))
    w2p = jnp.pad(w2.astype(jnp.float32), ((0, h_pad - h), (0, h_pad - h)))
    b2p = jnp.pad(b2.astype(jnp.float32).reshape(1, -1),
                  ((0, 0), (0, h_pad - h)))
    return w1p, b1p, w2p, b2p


@partial(jax.jit, static_argnames=("hidden_size",))
def gcn_forward(x, adj, w1p, b1p, w2p, b2p, *, hidden_size):
    n, f_in = x.shape
    f_pad, h_pad = w1p.shape

    # Zero-pad the input feature dim to match the padded W1 (exact).
    if f_pad != f_in:
        x = jnp.pad(x, ((0, 0), (0, f_pad - f_in)))
    x = x.astype(jnp.float32)

    # Degree normalization, computed outside the kernel (fused into this jit).
    # eps clamp is a no-op for graphs with self-loops / positive degrees.
    d = jnp.sum(adj.astype(jnp.float32), axis=1, keepdims=True)        # (N, 1)
    d_inv_sqrt = 1.0 / jnp.sqrt(jnp.maximum(d, 1e-12))                 # (N, 1)

    full = lambda a: pl.BlockSpec(a.shape, lambda: (0,) * a.ndim,
                                  memory_space=pltpu.VMEM)

    out_pad = pl.pallas_call(
        gcn_kernel,
        out_shape=jax.ShapeDtypeStruct((n, h_pad), jnp.float32),
        in_specs=[full(x), full(adj), full(d_inv_sqrt),
                  full(w1p), full(b1p), full(w2p), full(b2p)],
        out_specs=pl.BlockSpec((n, h_pad), lambda: (0, 0),
                               memory_space=pltpu.VMEM),
        compiler_params=pltpu.CompilerParams(
            vmem_limit_bytes=_VMEM_LIMIT_BYTES),
    )(x, adj, d_inv_sqrt, w1p, b1p, w2p, b2p)

    return out_pad[:, :hidden_size]


# ----------------------------------------------------------------------------
# Demo / correctness check
# ----------------------------------------------------------------------------
def xavier_init(key, size):
    in_dim = size[0]
    stddev = 1.0 / jnp.sqrt(in_dim / 2.0)
    return jax.random.normal(key, size, dtype=jnp.float32) * stddev


if __name__ == "__main__":
    N = 16          # number of graph nodes
    F_IN = 8        # input feature size
    HIDDEN = 32     # hidden size

    key = jax.random.PRNGKey(0)
    k_x, k_adj, k_w1, k_w2 = jax.random.split(key, 4)

    # Deterministic inputs.
    x = jax.random.normal(k_x, (N, F_IN), dtype=jnp.float32)
    # Symmetric positive adjacency with self loops (degrees > 0 -> no inf).
    a_raw = jax.random.uniform(k_adj, (N, N), dtype=jnp.float32)
    adj = (a_raw + a_raw.T) * 0.5 + jnp.eye(N, dtype=jnp.float32)

    # Deterministic parameter init (shapes per GCN.__init__).
    w1 = xavier_init(k_w1, (F_IN, HIDDEN))
    b1 = jnp.zeros((HIDDEN,), dtype=jnp.float32)
    w2 = xavier_init(k_w2, (HIDDEN, HIDDEN))
    b2 = jnp.zeros((HIDDEN,), dtype=jnp.float32)

    # Pad parameters once (kept padded for the lifetime of the model).
    w1p, b1p, w2p, b2p = prepare_gcn_params(w1, b1, w2, b2)

    out = gcn_forward(x, adj, w1p, b1p, w2p, b2p, hidden_size=HIDDEN)
    jax.block_until_ready(out)

    # Pure-JAX reference check (mirrors the PyTorch forward).
    d = adj.sum(1)
    d_inv_sqrt = d ** -0.5
    a_norm = jnp.diag(d_inv_sqrt) @ adj @ jnp.diag(d_inv_sqrt)
    h_ref = jnp.maximum(a_norm @ (x @ w1) + b1, 0.0)
    ref = a_norm @ (h_ref @ w2) + b2
    assert out.shape == (N, HIDDEN), f"bad output shape {out.shape}"
    assert jnp.allclose(out, ref, atol=1e-4, rtol=1e-4), "mismatch vs reference"

    print("KERNEL_OK")
</pallas_src>

<mosaic_0001>
module attributes {stable_mosaic.version = 11 : i64} {
  func.func @gcn_kernel(%arg0: memref<16x128xf32, #tpu.memory_space<vmem>>, %arg1: memref<16x16xf32, #tpu.memory_space<vmem>>, %arg2: memref<16x1xf32, #tpu.memory_space<vmem>>, %arg3: memref<128x128xf32, #tpu.memory_space<vmem>>, %arg4: memref<1x128xf32, #tpu.memory_space<vmem>>, %arg5: memref<128x128xf32, #tpu.memory_space<vmem>>, %arg6: memref<1x128xf32, #tpu.memory_space<vmem>>, %arg7: memref<16x128xf32, #tpu.memory_space<vmem>>) attributes {dimension_semantics = [], scalar_prefetch = 0 : i64, scratch_operands = 0 : i64, tpu.core_type = #tpu.core_type<tc>} {
    %c0 = arith.constant 0 : index
    %c0_0 = arith.constant 0 : index
    %0 = vector.load %arg1[%c0, %c0_0] : memref<16x16xf32, #tpu.memory_space<vmem>>, vector<16x16xf32>
    %c0_1 = arith.constant 0 : index
    %c0_2 = arith.constant 0 : index
    %1 = vector.load %arg2[%c0_1, %c0_2] : memref<16x1xf32, #tpu.memory_space<vmem>>, vector<16x1xf32>
    %c0_3 = arith.constant 0 : index
    %c0_4 = arith.constant 0 : index
    %2 = vector.load %arg0[%c0_3, %c0_4] : memref<16x128xf32, #tpu.memory_space<vmem>>, vector<16x128xf32>
    %c0_5 = arith.constant 0 : index
    %c0_6 = arith.constant 0 : index
    %3 = vector.load %arg3[%c0_5, %c0_6] : memref<128x128xf32, #tpu.memory_space<vmem>>, vector<128x128xf32>
    %cst = arith.constant dense<0.000000e+00> : vector<16x128xf32>
    %4 = tpu.matmul %2, %3, %cst {dimension_numbers = #tpu.dot_dimension_numbers<[1], [0], [0], [1], [0, 0, 1, 1], [], []>} : vector<16x128xf32>, vector<128x128xf32>, vector<16x128xf32> -> vector<16x128xf32>
    %5 = vector.broadcast %1 : vector<16x1xf32> to vector<16x128xf32>
    %6 = arith.mulf %5, %4 : vector<16x128xf32>
    %cst_7 = arith.constant dense<0.000000e+00> : vector<16x128xf32>
    %7 = tpu.matmul %0, %6, %cst_7 {dimension_numbers = #tpu.dot_dimension_numbers<[1], [0], [0], [1], [0, 0, 1, 1], [], []>} : vector<16x16xf32>, vector<16x128xf32>, vector<16x128xf32> -> vector<16x128xf32>
    %8 = vector.broadcast %1 : vector<16x1xf32> to vector<16x128xf32>
    %9 = arith.mulf %8, %7 : vector<16x128xf32>
    %c0_8 = arith.constant 0 : index
    %c0_9 = arith.constant 0 : index
    %10 = vector.load %arg4[%c0_8, %c0_9] : memref<1x128xf32, #tpu.memory_space<vmem>>, vector<1x128xf32>
    %11 = vector.broadcast %10 : vector<1x128xf32> to vector<16x128xf32>
    %12 = arith.addf %9, %11 : vector<16x128xf32>
    %cst_10 = arith.constant 0.000000e+00 : f32
    %13 = vector.broadcast %cst_10 : f32 to vector<16x128xf32>
    %14 = arith.maximumf %12, %13 : vector<16x128xf32>
    %c0_11 = arith.constant 0 : index
    %c0_12 = arith.constant 0 : index
    %15 = vector.load %arg5[%c0_11, %c0_12] : memref<128x128xf32, #tpu.memory_space<vmem>>, vector<128x128xf32>
    %cst_13 = arith.constant dense<0.000000e+00> : vector<16x128xf32>
    %16 = tpu.matmul %14, %15, %cst_13 {dimension_numbers = #tpu.dot_dimension_numbers<[1], [0], [0], [1], [0, 0, 1, 1], [], []>} : vector<16x128xf32>, vector<128x128xf32>, vector<16x128xf32> -> vector<16x128xf32>
    %17 = vector.broadcast %1 : vector<16x1xf32> to vector<16x128xf32>
    %18 = arith.mulf %17, %16 : vector<16x128xf32>
    %cst_14 = arith.constant dense<0.000000e+00> : vector<16x128xf32>
    %19 = tpu.matmul %0, %18, %cst_14 {dimension_numbers = #tpu.dot_dimension_numbers<[1], [0], [0], [1], [0, 0, 1, 1], [], []>} : vector<16x16xf32>, vector<16x128xf32>, vector<16x128xf32> -> vector<16x128xf32>
    %20 = vector.broadcast %1 : vector<16x1xf32> to vector<16x128xf32>
    %21 = arith.mulf %20, %19 : vector<16x128xf32>
    %c0_15 = arith.constant 0 : index
    %c0_16 = arith.constant 0 : index
    %22 = vector.load %arg6[%c0_15, %c0_16] : memref<1x128xf32, #tpu.memory_space<vmem>>, vector<1x128xf32>
    %23 = vector.broadcast %22 : vector<1x128xf32> to vector<16x128xf32>
    %24 = arith.addf %21, %23 : vector<16x128xf32>
    %c0_17 = arith.constant 0 : index
    %c0_18 = arith.constant 0 : index
    %25 = vector.load %arg7[%c0_17, %c0_18] : memref<16x128xf32, #tpu.memory_space<vmem>>, vector<16x128xf32>
    tpu.vector_store %arg7[%c0_17, %c0_18], %24 {strides = array<i32>} : memref<16x128xf32, #tpu.memory_space<vmem>>, vector<16x128xf32>,
    return
  }
}

</mosaic_0001>

<llo_original>
// kernel: gcn_forward.1
$region0: #{gcn_forward.1}
  #allocation0 [shape = 'u32[]', space=smem, size = 0x4, offset = 0x4, fixed_abs, tag = 'smem constant byte address 0x4 - core index']
  #allocation1 [shape = 'u32[144,128]{1,0:T(1,128)}', space=vmem, size = 0x12000, scoped, tag = 'internal scratch']
  %s0 = inlined_call_operand.vmem [shape: f32[16,128], index: 0, kind: input, shape index: {}]
  %s1 = inlined_call_operand.vmem [shape: f32[16,16], index: 1, kind: input, shape index: {}]
  %s2 = inlined_call_operand.vmem [shape: f32[16,1], index: 2, kind: input, shape index: {}]
  %s3 = inlined_call_operand.hbm [shape: f32[128,128], index: 3, kind: input, shape index: {}]
  %s4 = inlined_call_operand.vmem [shape: f32[1,128], index: 4, kind: input, shape index: {}]
  %s5 = inlined_call_operand.hbm [shape: f32[128,128], index: 5, kind: input, shape index: {}]
  %s6 = inlined_call_operand.vmem [shape: f32[1,128], index: 6, kind: input, shape index: {}]
  %s7 = inlined_call_operand.hbm [shape: f32[16,128], index: 7, kind: output, shape index: {}]
  %s8 = sld [smem:[#allocation0]]
  $region46: #{gcn_forward.1} parent=0
    _
  %s10 = ssub.s32 1, %s8
  %s11 = scalar_select 0, %s10, %s8
  $region1: #{gcn_forward.1} parent=0
    #allocation2 [shape = 'u8[65536]{0}', space=vmem, size = 0x10000, scoped, tag = 'input window, operand 3, single buffered']
    #allocation3 [shape = 's32[1]{0}', space=sflag, size = 0x4, scoped, tag = 'scoped memory for gcn_forward.1']
    #allocation4 [shape = 's32[1]{0}', space=sflag, size = 0x4, scoped, tag = 'scoped memory for gcn_forward.1']
    #allocation5 [shape = 'u8[65536]{0}', space=vmem, size = 0x10000, scoped, tag = 'input window, operand 5, single buffered']
    #allocation6 [shape = 's32[1]{0}', space=sflag, size = 0x4, scoped, tag = 'scoped memory for gcn_forward.1']
    #allocation7 [shape = 'u8[8192]{0}', space=vmem, size = 0x2000, scoped, tag = 'output window, operand 0, single buffered']
    %12 = vsyncpa [#allocation3], 0
    %13 = vsyncpa [#allocation6], 0
    %14 = vsyncpa [#allocation4], 0
    // Predicated region
    $region2: #{gcn_forward.1} parent=1 // pred_check
      _
    $region3: #{gcn_forward.1} parent=1 // pred_check_branch
      %16 = sbr.rel (0) target = $region5
    $region4: #{gcn_forward.1} parent=1 // pred_region
      _
    $region5: #{gcn_forward.1} parent=1 // pred_fallthru
      _
    // Predicated region
    $region6: #{gcn_forward.1} parent=1 // pred_check
      _
    $region7: #{gcn_forward.1} parent=1 // pred_check_branch
      %18 = sbr.rel (0) target = $region9
    $region8: #{gcn_forward.1} parent=1 // pred_region
      _
    $region9: #{gcn_forward.1} parent=1 // pred_fallthru
      _
    // Predicated region
    $region10: #{gcn_forward.1} parent=1 // pred_check
      _
    $region11: #{gcn_forward.1} parent=1 // pred_check_branch
      %20 = sbr.rel (0) target = $region13
    $region12: #{gcn_forward.1} parent=1 // pred_region
      _
    $region13: #{gcn_forward.1} parent=1 // pred_fallthru
      _
    // Predicated region
    $region14: #{gcn_forward.1} parent=1 // pred_check
      _
    $region15: #{gcn_forward.1} parent=1 // pred_check_branch
      %22 = sbr.rel (0) target = $region17
    $region16: #{gcn_forward.1} parent=1 // pred_region
      %s24 = ssub.s32 2048, 2048
      %25 = vsyncadd [#allocation3], %s24
      %s26 = sshll.u32 [#allocation2], 4
      %s27 = int_to_ptr.vmem [resolvable:$true] %s26
      %32 = dma.hbm_to_vmem [thread:$0]  %s3, 2048, %s27, [#allocation3], 128, 128, 8
    $region17: #{gcn_forward.1} parent=1 // pred_fallthru
      _
    // Predicated region
    $region18: #{gcn_forward.1} parent=1 // pred_check
      _
    $region19: #{gcn_forward.1} parent=1 // pred_check_branch
      %34 = sbr.rel (0) target = $region21
    $region20: #{gcn_forward.1} parent=1 // pred_region
      _
    $region21: #{gcn_forward.1} parent=1 // pred_fallthru
      _
    // Predicated region
    $region22: #{gcn_forward.1} parent=1 // pred_check
      _
    $region23: #{gcn_forward.1} parent=1 // pred_check_branch
      %36 = sbr.rel (0) target = $region25
    $region24: #{gcn_forward.1} parent=1 // pred_region
      %s38 = ssub.s32 2048, 2048
      %39 = vsyncadd [#allocation6], %s38
      %s40 = sshll.u32 [#allocation5], 4
      %s41 = int_to_ptr.vmem [resolvable:$true] %s40
      %46 = dma.hbm_to_vmem [thread:$0]  %s5, 2048, %s41, [#allocation6], 128, 128, 8
    $region25: #{gcn_forward.1} parent=1 // pred_fallthru
      _
    // Predicated region
    $region26: #{gcn_forward.1} parent=1 // pred_check
      _
    $region27: #{gcn_forward.1} parent=1 // pred_check_branch
      %48 = sbr.rel (0) target = $region29
    $region28: #{gcn_forward.1} parent=1 // pred_region
      _
    $region29: #{gcn_forward.1} parent=1 // pred_fallthru
      _
    // Predicated region
    $region30: #{gcn_forward.1} parent=1 // pred_check
      _
    $region31: #{gcn_forward.1} parent=1 // pred_check_branch
      %50 = sbr.rel (0) target = $region33
    $region32: #{gcn_forward.1} parent=1 // pred_region
      %51 = dma.done [#allocation3], 2048
    $region33: #{gcn_forward.1} parent=1 // pred_fallthru
      _
    // Predicated region
    $region34: #{gcn_forward.1} parent=1 // pred_check
      _
    $region35: #{gcn_forward.1} parent=1 // pred_check_branch
      %53 = sbr.rel (0) target = $region37
    $region36: #{gcn_forward.1} parent=1 // pred_region
      %54 = dma.done [#allocation6], 2048
    $region37: #{gcn_forward.1} parent=1 // pred_fallthru
      _
    %v55 = vld [vmem:[%s1] sm:$0xff]
    %v56 = vld [vmem:[%s1 + $0x8] sm:$0xff]
    %v57 = vld [vmem:[%s2] sm:$0xff]
    %v58 = vld [vmem:[%s2 + $0x8] sm:$0xff]
    %v59 = vld [vmem:[%s0] sm:$0xff]
    %v60 = vld [vmem:[%s0 + $0x8] sm:$0xff]
    %v61 = vld [vmem:[#allocation2] sm:$0xff]
    %v62 = vld [vmem:[#allocation2 + $0x8] sm:$0xff]
    %v63 = vld [vmem:[#allocation2 + $0x10] sm:$0xff]
    %v64 = vld [vmem:[#allocation2 + $0x18] sm:$0xff]
    %v65 = vld [vmem:[#allocation2 + $0x20] sm:$0xff]
    %v66 = vld [vmem:[#allocation2 + $0x28] sm:$0xff]
    %v67 = vld [vmem:[#allocation2 + $0x30] sm:$0xff]
    %v68 = vld [vmem:[#allocation2 + $0x38] sm:$0xff]
    %v69 = vld [vmem:[#allocation2 + $0x40] sm:$0xff]
    %v70 = vld [vmem:[#allocation2 + $0x48] sm:$0xff]
    %v71 = vld [vmem:[#allocation2 + $0x50] sm:$0xff]
    %v72 = vld [vmem:[#allocation2 + $0x58] sm:$0xff]
    %v73 = vld [vmem:[#allocation2 + $0x60] sm:$0xff]
    %v74 = vld [vmem:[#allocation2 + $0x68] sm:$0xff]
    %v75 = vld [vmem:[#allocation2 + $0x70] sm:$0xff]
    %v76 = vld [vmem:[#allocation2 + $0x78] sm:$0xff]
    %77 = vmatprep.subr.mxu0 0.0
    %78 = vmatpush1.msra.mxu0 %v61
    %79 = vmatprep.subr.mxu0 0.0
    %80 = vmatpush1.msra.mxu0 %v62
    %81 = vmatprep.subr.mxu0 0.0
    %82 = vmatpush1.msra.mxu0 %v63
    %83 = vmatprep.subr.mxu0 0.0
    %84 = vmatpush1.msra.mxu0 %v64
    %85 = vmatprep.subr.mxu0 0.0
    %86 = vmatpush1.msra.mxu0 %v65
    %87 = vmatprep.subr.mxu0 0.0
    %88 = vmatpush1.msra.mxu0 %v66
    %89 = vmatprep.subr.mxu0 0.0
    %90 = vmatpush1.msra.mxu0 %v67
    %91 = vmatprep.subr.mxu0 0.0
    %92 = vmatpush1.msra.mxu0 %v68
    %93 = vmatprep.subr.mxu0 0.0
    %94 = vmatpush1.msra.mxu0 %v69
    %95 = vmatprep.subr.mxu0 0.0
    %96 = vmatpush1.msra.mxu0 %v70
    %97 = vmatprep.subr.mxu0 0.0
    %98 = vmatpush1.msra.mxu0 %v71
    %99 = vmatprep.subr.mxu0 0.0
    %100 = vmatpush1.msra.mxu0 %v72
    %101 = vmatprep.subr.mxu0 0.0
    %102 = vmatpush1.msra.mxu0 %v73
    %103 = vmatprep.subr.mxu0 0.0
    %104 = vmatpush1.msra.mxu0 %v74
    %105 = vmatprep.subr.mxu0 0.0
    %106 = vmatpush1.msra.mxu0 %v75
    %107 = vmatprep.subr.mxu0 0.0
    %108 = vmatpush1.msra.mxu0 %v76
    %109 = vmatprep.subr.mxu0 0.0
    %110 = vmatpush1.msra.mxu0 0.0
    %111 = vmatprep.subr.mxu0 0.0
    %112 = vmatpush1.msra.mxu0 0.0
    %113 = vmatprep.subr.mxu0 0.0
    %114 = vmatpush1.msra.mxu0 0.0
    %115 = vmatprep.subr.mxu0 0.0
    %116 = vmatpush1.msra.mxu0 0.0
    %117 = vmatprep.subr.mxu0 0.0
    %118 = vmatpush1.msra.mxu0 0.0
    %119 = vmatprep.subr.mxu0 0.0
    %120 = vmatpush1.msra.mxu0 0.0
    %121 = vmatprep.subr.mxu0 0.0
    %122 = vmatpush1.msra.mxu0 0.0
    %123 = vmatprep.subr.mxu0 0.0
    %124 = vmatpush1.msra.mxu0 0.0
    %125 = vmatprep.subr.mxu0 0.0
    %126 = vmatpush1.msra.mxu0 0.0
    %127 = vmatprep.subr.mxu0 0.0
    %128 = vmatpush1.msra.mxu0 0.0
    %129 = vmatprep.subr.mxu0 0.0
    %130 = vmatpush1.msra.mxu0 0.0
    %131 = vmatprep.subr.mxu0 0.0
    %132 = vmatpush1.msra.mxu0 0.0
    %133 = vmatprep.subr.mxu0 0.0
    %134 = vmatpush1.msra.mxu0 0.0
    %135 = vmatprep.subr.mxu0 0.0
    %136 = vmatpush1.msra.mxu0 0.0
    %137 = vmatprep.subr.mxu0 0.0
    %138 = vmatpush1.msra.mxu0 0.0
    %139 = vmatprep.subr.mxu0 0.0
    %140 = vmatpush1.msra.mxu0 0.0
    %141 = vmatprep.mubr.f32.mxu0 0.0
    %142 = vmatmul.mubr.f32.gmra.mrb[0].mxu0 %v59
    %v143 = vpop.f32.mrb[0].mxu0
    %v144 = vadd.f32 0.0, %v143
    %v145 = vpop.f32.mrb[0].mxu0
    %146 = vmatprep.mubr.f32.mxu0 0.0
    %147 = vmatmul.mubr.f32.gmra.mrb[0].mxu0 %v60
    %v148 = vpop.f32.mrb[0].mxu0
    %v149 = vadd.f32 0.0, %v148
    %v150 = vpop.f32.mrb[0].mxu0
    %151 = vdwg.mxu0
    %153 = vset.pattern.permute.xlu0 0
    %154 = vperm.xlu0 %153, %v57
    %v155 = vpop.permute.xlu0 %154
    %158 = vset.pattern.permute.xlu0 0
    %159 = vperm.xlu0 %158, %v58
    %v160 = vpop.permute.xlu0 %159
    %v162 = vmul.f32 %v155, %v144
    %v163 = vmul.f32 %v160, %v149
    %vm164 = vcmask 130048
    %v166 = vsel %vm164, %v55, 0
    %v169 = vsel %vm164, %v56, 0
    %171 = vmatprep.subr.mxu0 0.0
    %172 = vmatpush1.msra.mxu0 %v162
    %173 = vmatprep.subr.mxu0 0.0
    %174 = vmatpush1.msra.mxu0 %v163
    %175 = vmatprep.subr.mxu0 0.0
    %176 = vmatpush1.msra.mxu0 0.0
    %177 = vmatprep.subr.mxu0 0.0
    %178 = vmatpush1.msra.mxu0 0.0
    %179 = vmatprep.subr.mxu0 0.0
    %180 = vmatpush1.msra.mxu0 0.0
    %181 = vmatprep.subr.mxu0 0.0
    %182 = vmatpush1.msra.mxu0 0.0
    %183 = vmatprep.subr.mxu0 0.0
    %184 = vmatpush1.msra.mxu0 0.0
    %185 = vmatprep.subr.mxu0 0.0
    %186 = vmatpush1.msra.mxu0 0.0
    %187 = vmatprep.subr.mxu0 0.0
    %188 = vmatpush1.msra.mxu0 0.0
    %189 = vmatprep.subr.mxu0 0.0
    %190 = vmatpush1.msra.mxu0 0.0
    %191 = vmatprep.subr.mxu0 0.0
    %192 = vmatpush1.msra.mxu0 0.0
    %193 = vmatprep.subr.mxu0 0.0
    %194 = vmatpush1.msra.mxu0 0.0
    %195 = vmatprep.subr.mxu0 0.0
    %196 = vmatpush1.msra.mxu0 0.0
    %197 = vmatprep.subr.mxu0 0.0
    %198 = vmatpush1.msra.mxu0 0.0
    %199 = vmatprep.subr.mxu0 0.0
    %200 = vmatpush1.msra.mxu0 0.0
    %201 = vmatprep.subr.mxu0 0.0
    %202 = vmatpush1.msra.mxu0 0.0
    %203 = vmatprep.subr.mxu0 0.0
    %204 = vmatpush1.msra.mxu0 0.0
    %205 = vmatprep.subr.mxu0 0.0
    %206 = vmatpush1.msra.mxu0 0.0
    %207 = vmatprep.subr.mxu0 0.0
    %208 = vmatpush1.msra.mxu0 0.0
    %209 = vmatprep.subr.mxu0 0.0
    %210 = vmatpush1.msra.mxu0 0.0
    %211 = vmatprep.subr.mxu0 0.0
    %212 = vmatpush1.msra.mxu0 0.0
    %213 = vmatprep.subr.mxu0 0.0
    %214 = vmatpush1.msra.mxu0 0.0
    %215 = vmatprep.subr.mxu0 0.0
    %216 = vmatpush1.msra.mxu0 0.0
    %217 = vmatprep.subr.mxu0 0.0
    %218 = vmatpush1.msra.mxu0 0.0
    %219 = vmatprep.subr.mxu0 0.0
    %220 = vmatpush1.msra.mxu0 0.0
    %221 = vmatprep.subr.mxu0 0.0
    %222 = vmatpush1.msra.mxu0 0.0
    %223 = vmatprep.subr.mxu0 0.0
    %224 = vmatpush1.msra.mxu0 0.0
    %225 = vmatprep.subr.mxu0 0.0
    %226 = vmatpush1.msra.mxu0 0.0
    %227 = vmatprep.subr.mxu0 0.0
    %228 = vmatpush1.msra.mxu0 0.0
    %229 = vmatprep.subr.mxu0 0.0
    %230 = vmatpush1.msra.mxu0 0.0
    %231 = vmatprep.subr.mxu0 0.0
    %232 = vmatpush1.msra.mxu0 0.0
    %233 = vmatprep.subr.mxu0 0.0
    %234 = vmatpush1.msra.mxu0 0.0
    %235 = vmatprep.mubr.f32.mxu0 0.0
    %236 = vmatmul.mubr.f32.gmra.mrb[0].mxu0 %v166
    %v237 = vpop.f32.mrb[0].mxu0
    %v238 = vadd.f32 0.0, %v237
    %v239 = vpop.f32.mrb[0].mxu0
    %240 = vmatprep.mubr.f32.mxu0 0.0
    %241 = vmatmul.mubr.f32.gmra.mrb[0].mxu0 %v169
    %v242 = vpop.f32.mrb[0].mxu0
    %v243 = vadd.f32 0.0, %v242
    %v244 = vpop.f32.mrb[0].mxu0
    %245 = vdwg.mxu0
    %v246 = vmul.f32 %v155, %v238
    %v247 = vmul.f32 %v160, %v243
    %v248 = vld [vmem:[%s4] sm:$0x1]
    %v250 = vlaneseq
    %v251 = vshrl.u32 %v250, 7
    %v252 = vsub.s32 0, %v251
    %v253 = vrot.slane %v248, %v252
    %v255 = vadd.f32 %v246, %v253
    %v256 = vadd.f32 %v247, %v253
    %v257 = vmax.f32 %v255, 0.0
    %v258 = vmax.f32 %v256, 0.0
    %v259 = vld [vmem:[#allocation5] sm:$0xff]
    %v260 = vld [vmem:[#allocation5 + $0x8] sm:$0xff]
    %v261 = vld [vmem:[#allocation5 + $0x10] sm:$0xff]
    %v262 = vld [vmem:[#allocation5 + $0x18] sm:$0xff]
    %v263 = vld [vmem:[#allocation5 + $0x20] sm:$0xff]
    %v264 = vld [vmem:[#allocation5 + $0x28] sm:$0xff]
    %v265 = vld [vmem:[#allocation5 + $0x30] sm:$0xff]
    %v266 = vld [vmem:[#allocation5 + $0x38] sm:$0xff]
    %v267 = vld [vmem:[#allocation5 + $0x40] sm:$0xff]
    %v268 = vld [vmem:[#allocation5 + $0x48] sm:$0xff]
    %v269 = vld [vmem:[#allocation5 + $0x50] sm:$0xff]
    %v270 = vld [vmem:[#allocation5 + $0x58] sm:$0xff]
    %v271 = vld [vmem:[#allocation5 + $0x60] sm:$0xff]
    %v272 = vld [vmem:[#allocation5 + $0x68] sm:$0xff]
    %v273 = vld [vmem:[#allocation5 + $0x70] sm:$0xff]
    %v274 = vld [vmem:[#allocation5 + $0x78] sm:$0xff]
    %275 = vmatprep.subr.mxu0 0.0
    %276 = vmatpush1.msra.mxu0 %v259
    %277 = vmatprep.subr.mxu0 0.0
    %278 = vmatpush1.msra.mxu0 %v260
    %279 = vmatprep.subr.mxu0 0.0
    %280 = vmatpush1.msra.mxu0 %v261
    %281 = vmatprep.subr.mxu0 0.0
    %282 = vmatpush1.msra.mxu0 %v262
    %283 = vmatprep.subr.mxu0 0.0
    %284 = vmatpush1.msra.mxu0 %v263
    %285 = vmatprep.subr.mxu0 0.0
    %286 = vmatpush1.msra.mxu0 %v264
    %287 = vmatprep.subr.mxu0 0.0
    %288 = vmatpush1.msra.mxu0 %v265
    %289 = vmatprep.subr.mxu0 0.0
    %290 = vmatpush1.msra.mxu0 %v266
    %291 = vmatprep.subr.mxu0 0.0
    %292 = vmatpush1.msra.mxu0 %v267
    %293 = vmatprep.subr.mxu0 0.0
    %294 = vmatpush1.msra.mxu0 %v268
    %295 = vmatprep.subr.mxu0 0.0
    %296 = vmatpush1.msra.mxu0 %v269
    %297 = vmatprep.subr.mxu0 0.0
    %298 = vmatpush1.msra.mxu0 %v270
    %299 = vmatprep.subr.mxu0 0.0
    %300 = vmatpush1.msra.mxu0 %v271
    %301 = vmatprep.subr.mxu0 0.0
    %302 = vmatpush1.msra.mxu0 %v272
    %303 = vmatprep.subr.mxu0 0.0
    %304 = vmatpush1.msra.mxu0 %v273
    %305 = vmatprep.subr.mxu0 0.0
    %306 = vmatpush1.msra.mxu0 %v274
    %307 = vmatprep.subr.mxu0 0.0
    %308 = vmatpush1.msra.mxu0 0.0
    %309 = vmatprep.subr.mxu0 0.0
    %310 = vmatpush1.msra.mxu0 0.0
    %311 = vmatprep.subr.mxu0 0.0
    %312 = vmatpush1.msra.mxu0 0.0
    %313 = vmatprep.subr.mxu0 0.0
    %314 = vmatpush1.msra.mxu0 0.0
    %315 = vmatprep.subr.mxu0 0.0
    %316 = vmatpush1.msra.mxu0 0.0
    %317 = vmatprep.subr.mxu0 0.0
    %318 = vmatpush1.msra.mxu0 0.0
    %319 = vmatprep.subr.mxu0 0.0
    %320 = vmatpush1.msra.mxu0 0.0
    %321 = vmatprep.subr.mxu0 0.0
    %322 = vmatpush1.msra.mxu0 0.0
    %323 = vmatprep.subr.mxu0 0.0
    %324 = vmatpush1.msra.mxu0 0.0
    %325 = vmatprep.subr.mxu0 0.0
    %326 = vmatpush1.msra.mxu0 0.0
    %327 = vmatprep.subr.mxu0 0.0
    %328 = vmatpush1.msra.mxu0 0.0
    %329 = vmatprep.subr.mxu0 0.0
    %330 = vmatpush1.msra.mxu0 0.0
    %331 = vmatprep.subr.mxu0 0.0
    %332 = vmatpush1.msra.mxu0 0.0
    %333 = vmatprep.subr.mxu0 0.0
    %334 = vmatpush1.msra.mxu0 0.0
    %335 = vmatprep.subr.mxu0 0.0
    %336 = vmatpush1.msra.mxu0 0.0
    %337 = vmatprep.subr.mxu0 0.0
    %338 = vmatpush1.msra.mxu0 0.0
    %339 = vmatprep.mubr.f32.mxu0 0.0
    %340 = vmatmul.mubr.f32.gmra.mrb[0].mxu0 %v257
    %v341 = vpop.f32.mrb[0].mxu0
    %v342 = vadd.f32 0.0, %v341
    %v343 = vpop.f32.mrb[0].mxu0
    %344 = vmatprep.mubr.f32.mxu0 0.0
    %345 = vmatmul.mubr.f32.gmra.mrb[0].mxu0 %v258
    %v346 = vpop.f32.mrb[0].mxu0
    %v347 = vadd.f32 0.0, %v346
    %v348 = vpop.f32.mrb[0].mxu0
    %349 = vdwg.mxu0
    %v350 = vmul.f32 %v155, %v342
    %v351 = vmul.f32 %v160, %v347
    %352 = vmatprep.subr.mxu0 0.0
    %353 = vmatpush1.msra.mxu0 %v350
    %354 = vmatprep.subr.mxu0 0.0
    %355 = vmatpush1.msra.mxu0 %v351
    %356 = vmatprep.subr.mxu0 0.0
    %357 = vmatpush1.msra.mxu0 0.0
    %358 = vmatprep.subr.mxu0 0.0
    %359 = vmatpush1.msra.mxu0 0.0
    %360 = vmatprep.subr.mxu0 0.0
    %361 = vmatpush1.msra.mxu0 0.0
    %362 = vmatprep.subr.mxu0 0.0
    %363 = vmatpush1.msra.mxu0 0.0
    %364 = vmatprep.subr.mxu0 0.0
    %365 = vmatpush1.msra.mxu0 0.0
    %366 = vmatprep.subr.mxu0 0.0
    %367 = vmatpush1.msra.mxu0 0.0
    %368 = vmatprep.subr.mxu0 0.0
    %369 = vmatpush1.msra.mxu0 0.0
    %370 = vmatprep.subr.mxu0 0.0
    %371 = vmatpush1.msra.mxu0 0.0
    %372 = vmatprep.subr.mxu0 0.0
    %373 = vmatpush1.msra.mxu0 0.0
    %374 = vmatprep.subr.mxu0 0.0
    %375 = vmatpush1.msra.mxu0 0.0
    %376 = vmatprep.subr.mxu0 0.0
    %377 = vmatpush1.msra.mxu0 0.0
    %378 = vmatprep.subr.mxu0 0.0
    %379 = vmatpush1.msra.mxu0 0.0
    %380 = vmatprep.subr.mxu0 0.0
    %381 = vmatpush1.msra.mxu0 0.0
    %382 = vmatprep.subr.mxu0 0.0
    %383 = vmatpush1.msra.mxu0 0.0
    %384 = vmatprep.subr.mxu0 0.0
    %385 = vmatpush1.msra.mxu0 0.0
    %386 = vmatprep.subr.mxu0 0.0
    %387 = vmatpush1.msra.mxu0 0.0
    %388 = vmatprep.subr.mxu0 0.0
    %389 = vmatpush1.msra.mxu0 0.0
    %390 = vmatprep.subr.mxu0 0.0
    %391 = vmatpush1.msra.mxu0 0.0
    %392 = vmatprep.subr.mxu0 0.0
    %393 = vmatpush1.msra.mxu0 0.0
    %394 = vmatprep.subr.mxu0 0.0
    %395 = vmatpush1.msra.mxu0 0.0
    %396 = vmatprep.subr.mxu0 0.0
    %397 = vmatpush1.msra.mxu0 0.0
    %398 = vmatprep.subr.mxu0 0.0
    %399 = vmatpush1.msra.mxu0 0.0
    %400 = vmatprep.subr.mxu0 0.0
    %401 = vmatpush1.msra.mxu0 0.0
    %402 = vmatprep.subr.mxu0 0.0
    %403 = vmatpush1.msra.mxu0 0.0
    %404 = vmatprep.subr.mxu0 0.0
    %405 = vmatpush1.msra.mxu0 0.0
    %406 = vmatprep.subr.mxu0 0.0
    %407 = vmatpush1.msra.mxu0 0.0
    %408 = vmatprep.subr.mxu0 0.0
    %409 = vmatpush1.msra.mxu0 0.0
    %410 = vmatprep.subr.mxu0 0.0
    %411 = vmatpush1.msra.mxu0 0.0
    %412 = vmatprep.subr.mxu0 0.0
    %413 = vmatpush1.msra.mxu0 0.0
    %414 = vmatprep.subr.mxu0 0.0
    %415 = vmatpush1.msra.mxu0 0.0
    %416 = vmatprep.mubr.f32.mxu0 0.0
    %417 = vmatmul.mubr.f32.gmra.mrb[0].mxu0 %v166
    %v418 = vpop.f32.mrb[0].mxu0
    %v419 = vadd.f32 0.0, %v418
    %v420 = vpop.f32.mrb[0].mxu0
    %421 = vmatprep.mubr.f32.mxu0 0.0
    %422 = vmatmul.mubr.f32.gmra.mrb[0].mxu0 %v169
    %v423 = vpop.f32.mrb[0].mxu0
    %v424 = vadd.f32 0.0, %v423
    %v425 = vpop.f32.mrb[0].mxu0
    %426 = vdwg.mxu0
    %v427 = vmul.f32 %v155, %v419
    %v428 = vmul.f32 %v160, %v424
    %v429 = vld [vmem:[%s6] sm:$0x1]
    %v431 = vlaneseq
    %v432 = vshrl.u32 %v431, 7
    %v433 = vsub.s32 0, %v432
    %v434 = vrot.slane %v429, %v433
    %v436 = vadd.f32 %v427, %v434
    %v437 = vadd.f32 %v428, %v434
    %438 = vst [vmem:[#allocation7] sm:$0xff] %v436
    %439 = vst [vmem:[#allocation7 + $0x8] sm:$0xff] %v437
    // Predicated region
    $region38: #{gcn_forward.1} parent=1 // pred_check
      _
    $region39: #{gcn_forward.1} parent=1 // pred_check_branch
      %441 = sbr.rel (0) target = $region41
    $region40: #{gcn_forward.1} parent=1 // pred_region
      %s443 = ssub.s32 256, 256
      %444 = vsyncadd [#allocation4], %s443
      %s445 = sshll.u32 [#allocation7], 4
      %s446 = int_to_ptr.vmem [resolvable:$true] %s445
      %451 = dma.vmem_to_hbm [thread:$0]  %s446, 256, %s7, [#allocation4], 128, 128, 8
    $region41: #{gcn_forward.1} parent=1 // pred_fallthru
      _
    // Predicated region
    $region42: #{gcn_forward.1} parent=1 // pred_check
      _
    $region43: #{gcn_forward.1} parent=1 // pred_check_branch
      %453 = sbr.rel (0) target = $region45
    $region44: #{gcn_forward.1} parent=1 // pred_region
      %454 = dma.done [#allocation4], 256
    $region45: #{gcn_forward.1} parent=1 // pred_fallthru
      _
    %455 = vsyncpa [#allocation3], 1
    %456 = vsyncpa [#allocation6], 1
    %457 = vsyncpa [#allocation4], 1

</llo_original>
